<compile_context>
chip_gen: v7x
topology: tpu7x:2x2x1
jax: 0.10.0
libtpu: 0.0.40
codegen_flags: <defaults>
</compile_context>

<pallas_src>
import numpy as np
import jax
import jax.numpy as jnp
from jax.experimental import pallas as pl
from jax.experimental.pallas import tpu as pltpu

# ---- synthetic config (matches DLinear.__init__ semantics) ------------------
SEQ_LEN = 8        # configs['sequence_length']
CHANNELS = 4       # configs['input_size']
PRED_LEN = 1       # configs.get('pred_len', 1)
KERNEL_SIZE = 3    # configs['Dlinear_kernel_size'] (odd -> output length == SEQ_LEN)
CH_OUT = 9         # self.channels_out
PAD = (KERNEL_SIZE - 1) // 2

N_OUT = 16         # output lanes: 9 useful cols padded to 16 (NOT 128 -> 8x fewer write bytes)
SUBLANE = 8        # batch tile kept a sublane multiple
TILE_B = 8192      # default batch tile; ~1.5 MiB/tile f32 -> fits all gens' scoped VMEM


def _fused_matmul_kernel(x_ref, w_ref, b_ref, o_ref):
    """One MXU matmul + bias; single (possibly masked-ragged) block store."""
    o_ref[...] = (
        jnp.dot(x_ref[...], w_ref[...], preferred_element_type=jnp.float32)
        + b_ref[...]
    ).astype(o_ref.dtype)


def _avg_pool_matrix(seq_len, kernel_size):
    """A (L, L) so that (A @ x) == replicate-pad AvgPool1d(K, stride=1) over time."""
    pad = (kernel_size - 1) // 2
    A = np.zeros((seq_len, seq_len), np.float32)
    for l in range(seq_len):
        for j in range(kernel_size):
            m = min(max(l + j - pad, 0), seq_len - 1)
            A[l, m] += 1.0 / kernel_size
    return jnp.asarray(A)


def _fold_params(params):
    """Fold decomposition + seasonal/trend Linears + last-step fc_projection into
    a single (L*C, N_OUT) weight and (1, N_OUT) bias (zero-padded beyond CH_OUT)."""
    assert KERNEL_SIZE % 2 == 1, "even AvgPool kernel changes output length; fold invalid"
    ws, bs, wt, bt, wp, bp = params
    L, C, O = SEQ_LEN, CHANNELS, CH_OUT
    A = _avg_pool_matrix(L, KERNEL_SIZE)                 # trend = A @ x (per batch, per channel)
    eye = jnp.eye(L, dtype=jnp.float32)
    w_comb = ws @ (eye - A) + wt @ A                     # (P, L)
    w_last = w_comb[PRED_LEN - 1]                        # (L,)   last prediction step
    beta = bs[PRED_LEN - 1] + bt[PRED_LEN - 1]           # scalar, shared over channels
    # y[b, o] = sum_{l,c} x[b,l,c] * w_last[l] * wp[o,c] + beta*sum_c wp[o,c] + bp[o]
    w_total = jnp.einsum('l,co->lco', w_last, wp.T).reshape(L * C, O)
    b_total = beta * jnp.sum(wp, axis=1) + bp            # (O,)
    w_pad = jnp.zeros((L * C, N_OUT), jnp.float32).at[:, :O].set(w_total)
    b_pad = jnp.zeros((1, N_OUT), jnp.float32).at[:, :O].set(b_total)
    return w_pad, b_pad


def make_dlinear_forward(params, *, tile_b=TILE_B, dtype=jnp.float32):
    """Fold params once; return a jitted forward(x) -> (elbow, wrist, fmg)."""
    w_pad, b_pad = _fold_params(params)
    w_pad = w_pad.astype(dtype)
    b_pad = b_pad.astype(dtype)
    K = SEQ_LEN * CHANNELS

    @jax.jit
    def _fwd(x):
        B = x.shape[0]
        x2 = x.reshape(B, K).astype(dtype)               # contiguous reshape: free under XLA
        # Batch tile: sublane multiple, capped at tile_b; NO input padding —
        # Pallas clips/masks the ragged last block.
        tb = min(tile_b, pl.cdiv(B, SUBLANE) * SUBLANE)
        grid = pl.cdiv(B, tb)
        itemsize = jnp.dtype(dtype).itemsize
        cost = pl.CostEstimate(
            flops=2 * B * K * N_OUT,
            transcendentals=0,
            bytes_accessed=itemsize * (B * K + K * N_OUT + N_OUT + B * N_OUT),
        )
        out = pl.pallas_call(
            _fused_matmul_kernel,
            out_shape=jax.ShapeDtypeStruct((B, N_OUT), dtype),
            grid=(grid,),
            in_specs=[
                pl.BlockSpec((tb, K), lambda i: (i, 0)),      # batch tile of x
                pl.BlockSpec((K, N_OUT), lambda i: (0, 0)),   # fused weight (resident)
                pl.BlockSpec((1, N_OUT), lambda i: (0, 0)),   # fused bias   (resident)
            ],
            out_specs=pl.BlockSpec((tb, N_OUT), lambda i: (i, 0)),
            compiler_params=pltpu.CompilerParams(
                dimension_semantics=("parallel",)),           # megacore-shards on v7x
            cost_estimate=cost,
        )(x2, w_pad, b_pad)
        y = out[:, :CH_OUT]
        return y[:, 3:6], y[:, 6:]

    def forward(x):
        elbow, wrist = _fwd(x)
        fmg = 0   # the torch module returns the literal int 0 here
        return elbow, wrist, fmg

    return forward


# ---- pure-JAX reference (mirrors the torch forward step by step) -------------
def ref_forward(x, params):
    ws, bs, wt, bt, wp, bp = params
    front = jnp.repeat(x[:, 0:1, :], PAD, axis=1)
    end = jnp.repeat(x[:, -1:, :], PAD, axis=1)
    xp = jnp.concatenate([front, x, end], axis=1)
    trend = jnp.stack([xp[:, j:j + SEQ_LEN, :] for j in range(KERNEL_SIZE)], 0).mean(0)
    seasonal = x - trend
    s = jnp.einsum('blc,pl->bcp', seasonal, ws) + bs      # (B, C, P)
    t = jnp.einsum('blc,pl->bcp', trend, wt) + bt
    comb = jnp.transpose(s + t, (0, 2, 1))                # (B, P, C)
    y = comb @ wp.T + bp                                  # (B, P, 9)
    y = y[:, -1, :]
    return y[:, 3:6], y[:, 6:]


if __name__ == "__main__":
    key = jax.random.PRNGKey(0)
    kx, k1, k2, k3, k4, k5, k6 = jax.random.split(key, 7)

    B = 2
    x = jax.random.normal(kx, (B, SEQ_LEN, CHANNELS), dtype=jnp.float32)

    # Deterministic synthetic parameters (shapes from the nn.Linear definitions).
    ws = 0.1 * jax.random.normal(k1, (PRED_LEN, SEQ_LEN), dtype=jnp.float32)
    bs = 0.1 * jax.random.normal(k2, (PRED_LEN,), dtype=jnp.float32)
    wt = 0.1 * jax.random.normal(k3, (PRED_LEN, SEQ_LEN), dtype=jnp.float32)
    bt = 0.1 * jax.random.normal(k4, (PRED_LEN,), dtype=jnp.float32)
    wp = 0.1 * jax.random.normal(k5, (CH_OUT, CHANNELS), dtype=jnp.float32)
    bp = 0.1 * jax.random.normal(k6, (CH_OUT,), dtype=jnp.float32)
    params = (ws, bs, wt, bt, wp, bp)

    dlinear = make_dlinear_forward(params)        # folds params once, jits forward
    elbow, wrist, fmg = dlinear(x)
    jax.block_until_ready((elbow, wrist))

    e_ref, w_ref = ref_forward(x, params)
    assert elbow.shape == (B, 3) and wrist.shape == (B, 3)
    assert jnp.allclose(elbow, e_ref, atol=1e-4, rtol=1e-4)
    assert jnp.allclose(wrist, w_ref, atol=1e-4, rtol=1e-4)
    assert fmg == 0

    print("KERNEL_OK")
</pallas_src>

<mosaic_0001>
module attributes {stable_mosaic.version = 11 : i64} {
  func.func @_fused_matmul_kernel(%arg0: i32, %arg1: memref<8x32xf32, #tpu.memory_space<vmem>>, %arg2: memref<32x16xf32, #tpu.memory_space<vmem>>, %arg3: memref<1x16xf32, #tpu.memory_space<vmem>>, %arg4: memref<8x16xf32, #tpu.memory_space<vmem>>) attributes {dimension_semantics = [#tpu.dimension_semantics<parallel>], iteration_bounds = array<i64: 1>, scalar_prefetch = 0 : i64, scratch_operands = 0 : i64, tpu.core_type = #tpu.core_type<tc>, window_params = [{transform_indices = @transform_0, window_bounds = array<i64: 8, 32>}, {pipeline_mode = #tpu.pipeline_mode<synchronous>, transform_indices = @transform_1, window_bounds = array<i64: 32, 16>}, {pipeline_mode = #tpu.pipeline_mode<synchronous>, transform_indices = @transform_2, window_bounds = array<i64: 1, 16>}, {transform_indices = @transform_3, window_bounds = array<i64: 8, 16>}]} {
    %c0 = arith.constant 0 : index
    %c0_0 = arith.constant 0 : index
    %0 = vector.load %arg1[%c0, %c0_0] : memref<8x32xf32, #tpu.memory_space<vmem>>, vector<8x32xf32>
    %c0_1 = arith.constant 0 : index
    %c0_2 = arith.constant 0 : index
    %1 = vector.load %arg2[%c0_1, %c0_2] : memref<32x16xf32, #tpu.memory_space<vmem>>, vector<32x16xf32>
    %cst = arith.constant dense<0.000000e+00> : vector<8x16xf32>
    %2 = tpu.matmul %0, %1, %cst {dimension_numbers = #tpu.dot_dimension_numbers<[1], [0], [0], [1], [0, 0, 1, 1], [], []>} : vector<8x32xf32>, vector<32x16xf32>, vector<8x16xf32> -> vector<8x16xf32>
    %c0_3 = arith.constant 0 : index
    %c0_4 = arith.constant 0 : index
    %3 = vector.load %arg3[%c0_3, %c0_4] : memref<1x16xf32, #tpu.memory_space<vmem>>, vector<1x16xf32>
    %4 = vector.broadcast %3 : vector<1x16xf32> to vector<8x16xf32>
    %5 = arith.addf %2, %4 : vector<8x16xf32>
    %c0_5 = arith.constant 0 : index
    %c0_6 = arith.constant 0 : index
    %6 = vector.load %arg4[%c0_5, %c0_6] : memref<8x16xf32, #tpu.memory_space<vmem>>, vector<8x16xf32>
    tpu.vector_store %arg4[%c0_5, %c0_6], %5 {strides = array<i32>} : memref<8x16xf32, #tpu.memory_space<vmem>>, vector<8x16xf32>,
    return
  }
  func.func @transform_0(%arg0: i32) -> (i32, i32) {
    %c0_i32 = arith.constant 0 : i32
    %c0_i32_0 = arith.constant 0 : i32
    return %arg0, %c0_i32 : i32, i32
  }
  func.func @transform_1(%arg0: i32) -> (i32, i32) {
    %c0_i32 = arith.constant 0 : i32
    %c0_i32_0 = arith.constant 0 : i32
    %c0_i32_1 = arith.constant 0 : i32
    return %c0_i32, %c0_i32_0 : i32, i32
  }
  func.func @transform_2(%arg0: i32) -> (i32, i32) {
    %c0_i32 = arith.constant 0 : i32
    %c0_i32_0 = arith.constant 0 : i32
    %c0_i32_1 = arith.constant 0 : i32
    return %c0_i32, %c0_i32_0 : i32, i32
  }
  func.func @transform_3(%arg0: i32) -> (i32, i32) {
    %c0_i32 = arith.constant 0 : i32
    %c0_i32_0 = arith.constant 0 : i32
    return %arg0, %c0_i32 : i32, i32
  }
}

</mosaic_0001>

<llo_original>
// kernel: _fwd.1
$region0: #{_fwd.1}
  #allocation0 [shape = 'u32[]', space=smem, size = 0x4, offset = 0x4, fixed_abs, tag = 'smem constant byte address 0x4 - core index']
  #allocation1 [shape = 'u32[144,128]{1,0:T(1,128)}', space=vmem, size = 0x12000, scoped, tag = 'internal scratch']
  %s0 = inlined_call_operand.vmem [shape: f32[2,32], index: 0, kind: input, shape index: {}]
  %s1 = inlined_call_operand.vmem [shape: f32[32,16], index: 1, kind: input, shape index: {}]
  %s2 = inlined_call_operand.vmem [shape: f32[1,16], index: 2, kind: input, shape index: {}]
  %s3 = inlined_call_operand.vmem [shape: f32[2,16], index: 3, kind: output, shape index: {}]
  %s4 = sld [smem:[#allocation0]]
  $region52: #{_fwd.1} parent=0
    _
  %s6 = ssub.s32 1, %s4
  %s7 = scalar_select 0, %s6, %s4
  $region1: #{_fwd.1} parent=0
    #allocation2 [shape = 'u8[4096]{0}', space=vmem, size = 0x1000, scoped, tag = 'output window, operand 0, single buffered']
    // Predicated region
    $region2: #{_fwd.1} parent=1 // pred_check
      _
    $region3: #{_fwd.1} parent=1 // pred_check_branch
      %9 = sbr.rel (0) target = $region5
    $region4: #{_fwd.1} parent=1 // pred_region
      _
    $region5: #{_fwd.1} parent=1 // pred_fallthru
      _
    // Predicated region
    $region6: #{_fwd.1} parent=1 // pred_check
      _
    $region7: #{_fwd.1} parent=1 // pred_check_branch
      %11 = sbr.rel (0) target = $region9
    $region8: #{_fwd.1} parent=1 // pred_region
      _
    $region9: #{_fwd.1} parent=1 // pred_fallthru
      _
    // Predicated region
    $region10: #{_fwd.1} parent=1 // pred_check
      _
    $region11: #{_fwd.1} parent=1 // pred_check_branch
      %13 = sbr.rel (0) target = $region13
    $region12: #{_fwd.1} parent=1 // pred_region
      _
    $region13: #{_fwd.1} parent=1 // pred_fallthru
      _
    %v14 = vld [vmem:[%s0] sm:$0xff]
    %v15 = vld [vmem:[%s1] sm:$0xff]
    %v16 = vld [vmem:[%s1 + $0x8] sm:$0xff]
    %v17 = vld [vmem:[%s1 + $0x10] sm:$0xff]
    %v18 = vld [vmem:[%s1 + $0x18] sm:$0xff]
    %v19 = vld [vmem:[%s2] sm:$0x1]
    %v21 = vlaneseq
    %v22 = vshrl.u32 %v21, 7
    %v23 = vsub.s32 0, %v22
    %v24 = vrot.slane %v19, %v23
    %vm26 = vcmask 261120
    %v28 = vsel %vm26, %v14, 0
    %30 = vmatprep.subr.mxu0 0.0
    %31 = vmatpush1.msra.mxu0 %v15
    %32 = vmatprep.subr.mxu0 0.0
    %33 = vmatpush1.msra.mxu0 %v16
    %34 = vmatprep.subr.mxu0 0.0
    %35 = vmatpush1.msra.mxu0 %v17
    %36 = vmatprep.subr.mxu0 0.0
    %37 = vmatpush1.msra.mxu0 %v18
    %38 = vmatprep.subr.mxu0 0.0
    %39 = vmatpush1.msra.mxu0 0.0
    %40 = vmatprep.subr.mxu0 0.0
    %41 = vmatpush1.msra.mxu0 0.0
    %42 = vmatprep.subr.mxu0 0.0
    %43 = vmatpush1.msra.mxu0 0.0
    %44 = vmatprep.subr.mxu0 0.0
    %45 = vmatpush1.msra.mxu0 0.0
    %46 = vmatprep.subr.mxu0 0.0
    %47 = vmatpush1.msra.mxu0 0.0
    %48 = vmatprep.subr.mxu0 0.0
    %49 = vmatpush1.msra.mxu0 0.0
    %50 = vmatprep.subr.mxu0 0.0
    %51 = vmatpush1.msra.mxu0 0.0
    %52 = vmatprep.subr.mxu0 0.0
    %53 = vmatpush1.msra.mxu0 0.0
    %54 = vmatprep.subr.mxu0 0.0
    %55 = vmatpush1.msra.mxu0 0.0
    %56 = vmatprep.subr.mxu0 0.0
    %57 = vmatpush1.msra.mxu0 0.0
    %58 = vmatprep.subr.mxu0 0.0
    %59 = vmatpush1.msra.mxu0 0.0
    %60 = vmatprep.subr.mxu0 0.0
    %61 = vmatpush1.msra.mxu0 0.0
    %62 = vmatprep.subr.mxu0 0.0
    %63 = vmatpush1.msra.mxu0 0.0
    %64 = vmatprep.subr.mxu0 0.0
    %65 = vmatpush1.msra.mxu0 0.0
    %66 = vmatprep.subr.mxu0 0.0
    %67 = vmatpush1.msra.mxu0 0.0
    %68 = vmatprep.subr.mxu0 0.0
    %69 = vmatpush1.msra.mxu0 0.0
    %70 = vmatprep.subr.mxu0 0.0
    %71 = vmatpush1.msra.mxu0 0.0
    %72 = vmatprep.subr.mxu0 0.0
    %73 = vmatpush1.msra.mxu0 0.0
    %74 = vmatprep.subr.mxu0 0.0
    %75 = vmatpush1.msra.mxu0 0.0
    %76 = vmatprep.subr.mxu0 0.0
    %77 = vmatpush1.msra.mxu0 0.0
    %78 = vmatprep.subr.mxu0 0.0
    %79 = vmatpush1.msra.mxu0 0.0
    %80 = vmatprep.subr.mxu0 0.0
    %81 = vmatpush1.msra.mxu0 0.0
    %82 = vmatprep.subr.mxu0 0.0
    %83 = vmatpush1.msra.mxu0 0.0
    %84 = vmatprep.subr.mxu0 0.0
    %85 = vmatpush1.msra.mxu0 0.0
    %86 = vmatprep.subr.mxu0 0.0
    %87 = vmatpush1.msra.mxu0 0.0
    %88 = vmatprep.subr.mxu0 0.0
    %89 = vmatpush1.msra.mxu0 0.0
    %90 = vmatprep.subr.mxu0 0.0
    %91 = vmatpush1.msra.mxu0 0.0
    %92 = vmatprep.subr.mxu0 0.0
    %93 = vmatpush1.msra.mxu0 0.0
    %94 = vmatprep.mubr.f32.mxu0 0.0
    %95 = vmatmul.mubr.f32.gmra.mrb[0].mxu0 %v28
    %v96 = vpop.f32.mrb[0].mxu0
    %v97 = vadd.f32 %v24, %v96
    %v98 = vpop.f32.mrb[0].mxu0
    %99 = vdwg.mxu0
    %vm100 = vcmask 130048
    %101 = vst.msk [vmem:[#allocation2] sm:$0xff] %vm100, %v97
    // Predicated region
    $region14: #{_fwd.1} parent=1 // pred_check
      _
    $region15: #{_fwd.1} parent=1 // pred_check_branch
      %103 = sbr.rel (0) target = $region17
    $region16: #{_fwd.1} parent=1 // pred_region
      // Predicated region
      $region18: #{_fwd.1} parent=16 // pred_check
        _
      $region19: #{_fwd.1} parent=16 // pred_check_branch
        %105 = sbr.rel (0) target = $region21
      $region20: #{_fwd.1} parent=16 // pred_region
        // Predicated region
        $region22: #{_fwd.1} parent=20 // pred_check
          _
        $region23: #{_fwd.1} parent=20 // pred_check_branch
          %107 = sbr.rel target = $region25
        $region24: #{_fwd.1} parent=20 // pred_region
          // Predicated region
          $region37: #{_fwd.1} parent=24 // pred_check
            _
          $region38: #{_fwd.1} parent=24 // pred_check_branch
            %122 = sbr.rel (0) target = $region40
          $region39: #{_fwd.1} parent=24 // pred_region
            loop: start=0, step=1, limit=1
            $region41: #{_fwd.1} parent=39 // loop_pre_header
              _
            $region42: #{_fwd.1} parent=39 // loop_header
              %s125 = sphi 0, %s129
              %p126 = scmp.ge.s32.totalorder %s125, 1
              %s130 = sphi [#allocation2], [#allocation2]
              %s131 = sphi %s3, %s3
            $region43: #{_fwd.1} parent=39 // loop_header_branch
              %128 = sbr.rel (%p126) target = $region47
            $region44: #{_fwd.1} parent=39 // loop_body
              %v132 = vld [vmem:[%s130] sm:$0x3]
              %133 = vst [vmem:[%s131] sm:$0x3] %v132
            $region45: #{_fwd.1} parent=39 // loop_footer
              %s129 = sadd.s32 1, %s125
            $region46: #{_fwd.1} parent=39 // loop_footer_branch
              %124 = sbr.rel target = $region42
            $region47: #{_fwd.1} parent=39 // loop_exit
              _
          $region40: #{_fwd.1} parent=24 // pred_fallthru
            _
        $region25: #{_fwd.1} parent=20 // pred_fallthru
          _
        // Predicated region
        $region26: #{_fwd.1} parent=20 // pred_check
          _
        $region27: #{_fwd.1} parent=20 // pred_check_branch
          %109 = sbr.rel (0) target = $region29
        $region28: #{_fwd.1} parent=20 // pred_region
          loop: start=0, step=1, limit=1
          $region30: #{_fwd.1} parent=28 // loop_pre_header
            _
          $region31: #{_fwd.1} parent=28 // loop_header
            %s112 = sphi 0, %s116
            %p113 = scmp.ge.s32.totalorder %s112, 1
            %s117 = sphi [#allocation2], [#allocation2]
            %s118 = sphi %s3, %s3
          $region32: #{_fwd.1} parent=28 // loop_header_branch
            %115 = sbr.rel (%p113) target = $region36
          $region33: #{_fwd.1} parent=28 // loop_body
            %v119 = vld [vmem:[%s117] sm:$0x3]
            %120 = vst [vmem:[%s118] sm:$0x3] %v119
          $region34: #{_fwd.1} parent=28 // loop_footer
            %s116 = sadd.s32 1, %s112
          $region35: #{_fwd.1} parent=28 // loop_footer_branch
            %111 = sbr.rel target = $region31
          $region36: #{_fwd.1} parent=28 // loop_exit
            _
        $region29: #{_fwd.1} parent=20 // pred_fallthru
          _
      $region21: #{_fwd.1} parent=16 // pred_fallthru
        _
      %134 = vnop
    $region17: #{_fwd.1} parent=1 // pred_fallthru
      _
    // Predicated region
    $region48: #{_fwd.1} parent=1 // pred_check
      _
    $region49: #{_fwd.1} parent=1 // pred_check_branch
      %136 = sbr.rel (0) target = $region51
    $region50: #{_fwd.1} parent=1 // pred_region
      _
    $region51: #{_fwd.1} parent=1 // pred_fallthru
      _

</llo_original>
